<compile_context>
chip_gen: v6e
topology: v6e:2x2x1
jax: 0.10.0
libtpu: 0.0.40
codegen_flags: <defaults>
</compile_context>

<pallas_src>
import jax
import jax.numpy as jnp
from jax.experimental import pallas as pl
from jax.experimental.pallas import tpu as pltpu


def _make_attention_pool_kernel(n_total: int, block_n: int):
    needs_mask = (n_total % block_n) != 0

    def kernel(x_ref, w_ref, b_ref, gamma_ref, beta_ref, out_ref,
               m_sc, l_sc, acc_sc):
        i = pl.program_id(0)

        @pl.when(i == 0)
        def _():
            m_sc[...] = jnp.full_like(m_sc, -jnp.inf)
            l_sc[...] = jnp.zeros_like(l_sc)
            acc_sc[...] = jnp.zeros_like(acc_sc)

        x = x_ref[...].astype(jnp.float32)          # (TN, D)
        w = w_ref[...].astype(jnp.float32)          # (1, D)
        b = b_ref[0]                                # scalar bias (SMEM)

        # scores: VPU multiply + lane (XLU) reduce; avoids a 1-column MXU matmul.
        if needs_mask:
            row = jax.lax.broadcasted_iota(jnp.int32, (block_n, 1), 0) + i * block_n
            valid = row < n_total                   # (TN, 1)
            x = jnp.where(valid, x, 0.0)            # zero padded rows (keeps acc clean)
            scores = jnp.sum(x * w, axis=-1, keepdims=True) + b     # (TN, 1)
            scores = jnp.where(valid, scores, -jnp.inf)
        else:
            scores = jnp.sum(x * w, axis=-1, keepdims=True) + b     # (TN, 1)

        # Online-softmax update with an unnormalized accumulator.
        m_prev = m_sc[...]                                           # (1, 1)
        m_new = jnp.maximum(m_prev, jnp.max(scores, axis=0, keepdims=True))
        a = jnp.exp(m_prev - m_new)                                  # rescale factor
        e = jnp.exp(scores - m_new)                                  # (TN, 1)
        l_sc[...] = a * l_sc[...] + jnp.sum(e, axis=0, keepdims=True)
        acc_sc[...] = a * acc_sc[...] + jnp.sum(x * e, axis=0, keepdims=True)
        m_sc[...] = m_new

        @pl.when(i == pl.num_programs(0) - 1)
        def _():
            # Deferred normalization: one reciprocal instead of per-row divides.
            aggregated = acc_sc[...] * pl.reciprocal(l_sc[...], approx=False)  # (1, D)
            # LayerNorm over features (torch default eps=1e-5, biased variance).
            mean = jnp.mean(aggregated, axis=-1, keepdims=True)
            centered = aggregated - mean
            var = jnp.mean(centered * centered, axis=-1, keepdims=True)
            normed = centered * jax.lax.rsqrt(var + 1e-5)
            gamma = gamma_ref[...].astype(jnp.float32)
            beta = beta_ref[...].astype(jnp.float32)
            out_ref[...] = (normed * gamma + beta).astype(out_ref.dtype)

    return kernel


def attention_pool(x, w_proj, b_proj, gamma, beta, *, block_n: int = 512):
    """x: (N, D). Returns (1, D) with x.dtype."""
    n, d = x.shape

    # Node-tile size: full N if it fits a single tile, otherwise a sublane-aligned
    # tile (block second-to-last dim must be a multiple of 8 or equal N).
    if n <= block_n:
        tn = n
    else:
        tn = max(8, (block_n // 8) * 8)
    grid = (pl.cdiv(n, tn),)

    w_row = w_proj.reshape(1, d).astype(jnp.float32)    # Linear weight (1, D)
    b1 = b_proj.reshape(1).astype(jnp.float32)          # scalar bias -> SMEM
    gamma2 = gamma.reshape(1, d)
    beta2 = beta.reshape(1, d)

    kernel = _make_attention_pool_kernel(n, tn)

    # TODO(synk): batching many independent pools as (B, N, D) behind a leading
    # "parallel" grid axis would amortize per-call overhead and use both v7x
    # TensorCores; the module interface is a single (N, D) pool, so it is kept 1-D.
    return pl.pallas_call(
        kernel,
        out_shape=jax.ShapeDtypeStruct((1, d), x.dtype),
        grid_spec=pltpu.PrefetchScalarGridSpec(
            num_scalar_prefetch=0,
            grid=grid,
            in_specs=[
                pl.BlockSpec((tn, d), lambda i: (i, 0)),             # x: streamed N-tiles
                pl.BlockSpec((1, d), lambda i: (0, 0)),              # w: resident
                pl.BlockSpec(memory_space=pltpu.MemorySpace.SMEM),   # bias: SMEM scalar
                pl.BlockSpec((1, d), lambda i: (0, 0)),              # gamma: resident
                pl.BlockSpec((1, d), lambda i: (0, 0)),              # beta: resident
            ],
            out_specs=pl.BlockSpec((1, d), lambda i: (0, 0)),
            scratch_shapes=[
                pltpu.VMEM((1, 1), jnp.float32),   # running max m
                pltpu.VMEM((1, 1), jnp.float32),   # running denominator l
                pltpu.VMEM((1, d), jnp.float32),   # unnormalized (1, D) accumulator
            ],
        ),
        compiler_params=pltpu.CompilerParams(
            dimension_semantics=("arbitrary",),
        ),
    )(x, w_row, b1, gamma2, beta2)


def attention_pool_ref(x, w_proj, b_proj, gamma, beta):
    """Pure-JAX reference mirroring the PyTorch forward."""
    scores = x @ w_proj.reshape(-1, 1) + b_proj.reshape(1, 1)    # (N, 1)
    weights = jax.nn.softmax(scores, axis=0)                     # (N, 1)
    aggregated = jnp.sum(x * weights, axis=0, keepdims=True)     # (1, D)
    mean = jnp.mean(aggregated, axis=-1, keepdims=True)
    var = jnp.mean((aggregated - mean) ** 2, axis=-1, keepdims=True)
    return ((aggregated - mean) / jnp.sqrt(var + 1e-5)) * gamma.reshape(1, -1) + beta.reshape(1, -1)


if __name__ == "__main__":
    key = jax.random.PRNGKey(0)
    k_x, k_w, k_b, k_g, k_be = jax.random.split(key, 5)

    # N deliberately not a multiple of the 128-row tile -> exercises streaming + tail masking.
    num_nodes, input_dim = 300, 128

    x = jax.random.normal(k_x, (num_nodes, input_dim), dtype=jnp.float32)
    # Deterministic synthetic parameters (shapes from the module __init__).
    w_proj = jax.random.normal(k_w, (1, input_dim), dtype=jnp.float32) * 0.1
    b_proj = jax.random.normal(k_b, (1,), dtype=jnp.float32) * 0.1
    gamma = 1.0 + 0.1 * jax.random.normal(k_g, (input_dim,), dtype=jnp.float32)
    beta = 0.1 * jax.random.normal(k_be, (input_dim,), dtype=jnp.float32)

    out = attention_pool(x, w_proj, b_proj, gamma, beta, block_n=128)
    out = jax.block_until_ready(out)

    ref = attention_pool_ref(x, w_proj, b_proj, gamma, beta)
    assert out.shape == (1, input_dim)
    assert jnp.allclose(out, ref, atol=1e-4, rtol=1e-4), "mismatch vs reference"

    print("KERNEL_OK")
</pallas_src>

<mosaic_0001>
module attributes {stable_mosaic.version = 11 : i64} {
  func.func @kernel(%arg0: i32, %arg1: memref<128x128xf32, #tpu.memory_space<vmem>>, %arg2: memref<1x128xf32, #tpu.memory_space<vmem>>, %arg3: memref<1xf32, #tpu.memory_space<smem>>, %arg4: memref<1x128xf32, #tpu.memory_space<vmem>>, %arg5: memref<1x128xf32, #tpu.memory_space<vmem>>, %arg6: memref<1x128xf32, #tpu.memory_space<vmem>>, %arg7: memref<1x1xf32, #tpu.memory_space<vmem>>, %arg8: memref<1x1xf32, #tpu.memory_space<vmem>>, %arg9: memref<1x128xf32, #tpu.memory_space<vmem>>) attributes {dimension_semantics = [#tpu.dimension_semantics<arbitrary>], iteration_bounds = array<i64: 3>, scalar_prefetch = 0 : i64, scratch_operands = 3 : i64, tpu.core_type = #tpu.core_type<tc>, window_params = [{transform_indices = @transform_0, window_bounds = array<i64: 128, 128>}, {pipeline_mode = #tpu.pipeline_mode<synchronous>, transform_indices = @transform_1, window_bounds = array<i64: 1, 128>}, {transform_indices = @transform_2, window_bounds = array<i64: 1>}, {pipeline_mode = #tpu.pipeline_mode<synchronous>, transform_indices = @transform_3, window_bounds = array<i64: 1, 128>}, {pipeline_mode = #tpu.pipeline_mode<synchronous>, transform_indices = @transform_4, window_bounds = array<i64: 1, 128>}, {pipeline_mode = #tpu.pipeline_mode<synchronous>, transform_indices = @transform_5, window_bounds = array<i64: 1, 128>}]} {
    %c0_i32 = arith.constant 0 : i32
    %0 = arith.cmpi eq, %arg0, %c0_i32 : i32
    %1 = arith.extui %0 : i1 to i32
    %c0_i32_0 = arith.constant 0 : i32
    %2 = arith.cmpi ne, %1, %c0_i32_0 : i32
    scf.if %2 {
      %cst_23 = arith.constant 0xFF800000 : f32
      %52 = vector.broadcast %cst_23 : f32 to vector<1x1xf32>
      %c0_24 = arith.constant 0 : index
      %c0_25 = arith.constant 0 : index
      %53 = vector.load %arg7[%c0_24, %c0_25] : memref<1x1xf32, #tpu.memory_space<vmem>>, vector<1x1xf32>
      tpu.vector_store %arg7[%c0_24, %c0_25], %52 {strides = array<i32>} : memref<1x1xf32, #tpu.memory_space<vmem>>, vector<1x1xf32>,
      %cst_26 = arith.constant 0.000000e+00 : f32
      %54 = vector.broadcast %cst_26 : f32 to vector<1x1xf32>
      %c0_27 = arith.constant 0 : index
      %c0_28 = arith.constant 0 : index
      %55 = vector.load %arg8[%c0_27, %c0_28] : memref<1x1xf32, #tpu.memory_space<vmem>>, vector<1x1xf32>
      tpu.vector_store %arg8[%c0_27, %c0_28], %54 {strides = array<i32>} : memref<1x1xf32, #tpu.memory_space<vmem>>, vector<1x1xf32>,
      %cst_29 = arith.constant 0.000000e+00 : f32
      %56 = vector.broadcast %cst_29 : f32 to vector<1x128xf32>
      %c0_30 = arith.constant 0 : index
      %c0_31 = arith.constant 0 : index
      %57 = vector.load %arg9[%c0_30, %c0_31] : memref<1x128xf32, #tpu.memory_space<vmem>>, vector<1x128xf32>
      tpu.vector_store %arg9[%c0_30, %c0_31], %56 {strides = array<i32>} : memref<1x128xf32, #tpu.memory_space<vmem>>, vector<1x128xf32>,
    } else {
    }
    %c0 = arith.constant 0 : index
    %c0_1 = arith.constant 0 : index
    %3 = vector.load %arg1[%c0, %c0_1] : memref<128x128xf32, #tpu.memory_space<vmem>>, vector<128x128xf32>
    %c0_2 = arith.constant 0 : index
    %c0_3 = arith.constant 0 : index
    %4 = vector.load %arg2[%c0_2, %c0_3] : memref<1x128xf32, #tpu.memory_space<vmem>>, vector<1x128xf32>
    %c0_4 = arith.constant 0 : index
    %5 = memref.load %arg3[%c0_4] : memref<1xf32, #tpu.memory_space<smem>>
    %6 = tpu.iota {dimensions = array<i32: 0>} : vector<128x1xi32>
    %c128_i32 = arith.constant 128 : i32
    %7 = arith.muli %arg0, %c128_i32 : i32
    %8 = vector.broadcast %7 : i32 to vector<128x1xi32>
    %9 = arith.addi %6, %8 : vector<128x1xi32>
    %c300_i32 = arith.constant 300 : i32
    %10 = vector.broadcast %c300_i32 : i32 to vector<128x1xi32>
    %11 = arith.cmpi slt, %9, %10 : vector<128x1xi32>
    %cst = arith.constant 0.000000e+00 : f32
    %12 = vector.shape_cast %11 : vector<128x1xi1> to vector<128x1xi1>
    %13 = vector.broadcast %12 : vector<128x1xi1> to vector<128x128xi1>
    %14 = vector.broadcast %cst : f32 to vector<128x128xf32>
    %15 = arith.select %13, %3, %14 : vector<128x128xi1>, vector<128x128xf32>
    %16 = vector.broadcast %4 : vector<1x128xf32> to vector<128x128xf32>
    %17 = arith.mulf %15, %16 : vector<128x128xf32>
    %cst_5 = arith.constant dense<0.000000e+00> : vector<128xf32>
    %18 = vector.multi_reduction <add>, %17, %cst_5 [1] : vector<128x128xf32> to vector<128xf32>
    %19 = vector.shape_cast %18 : vector<128xf32> to vector<128x1xf32>
    %20 = vector.broadcast %5 : f32 to vector<128x1xf32>
    %21 = arith.addf %19, %20 : vector<128x1xf32>
    %cst_6 = arith.constant 0xFF800000 : f32
    %22 = vector.broadcast %cst_6 : f32 to vector<128x1xf32>
    %23 = arith.select %11, %21, %22 : vector<128x1xi1>, vector<128x1xf32>
    %c0_7 = arith.constant 0 : index
    %c0_8 = arith.constant 0 : index
    %24 = vector.load %arg7[%c0_7, %c0_8] : memref<1x1xf32, #tpu.memory_space<vmem>>, vector<1x1xf32>
    %cst_9 = arith.constant dense<0xFF800000> : vector<1xf32>
    %25 = vector.multi_reduction <maximumf>, %23, %cst_9 [0] : vector<128x1xf32> to vector<1xf32>
    %26 = vector.shape_cast %25 : vector<1xf32> to vector<1x1xf32>
    %27 = arith.maximumf %24, %26 : vector<1x1xf32>
    %28 = arith.subf %24, %27 : vector<1x1xf32>
    %29 = math.exp %28 : vector<1x1xf32>
    %30 = vector.broadcast %27 : vector<1x1xf32> to vector<128x1xf32>
    %31 = arith.subf %23, %30 : vector<128x1xf32>
    %32 = math.exp %31 : vector<128x1xf32>
    %c0_10 = arith.constant 0 : index
    %c0_11 = arith.constant 0 : index
    %33 = vector.load %arg8[%c0_10, %c0_11] : memref<1x1xf32, #tpu.memory_space<vmem>>, vector<1x1xf32>
    %34 = arith.mulf %29, %33 : vector<1x1xf32>
    %cst_12 = arith.constant dense<0.000000e+00> : vector<1xf32>
    %35 = vector.multi_reduction <add>, %32, %cst_12 [0] : vector<128x1xf32> to vector<1xf32>
    %36 = vector.shape_cast %35 : vector<1xf32> to vector<1x1xf32>
    %37 = arith.addf %34, %36 : vector<1x1xf32>
    %c0_13 = arith.constant 0 : index
    %c0_14 = arith.constant 0 : index
    %38 = vector.load %arg8[%c0_13, %c0_14] : memref<1x1xf32, #tpu.memory_space<vmem>>, vector<1x1xf32>
    tpu.vector_store %arg8[%c0_13, %c0_14], %37 {strides = array<i32>} : memref<1x1xf32, #tpu.memory_space<vmem>>, vector<1x1xf32>,
    %c0_15 = arith.constant 0 : index
    %c0_16 = arith.constant 0 : index
    %39 = vector.load %arg9[%c0_15, %c0_16] : memref<1x128xf32, #tpu.memory_space<vmem>>, vector<1x128xf32>
    %40 = vector.broadcast %29 : vector<1x1xf32> to vector<1x128xf32>
    %41 = arith.mulf %40, %39 : vector<1x128xf32>
    %42 = vector.broadcast %32 : vector<128x1xf32> to vector<128x128xf32>
    %43 = arith.mulf %15, %42 : vector<128x128xf32>
    %cst_17 = arith.constant dense<0.000000e+00> : vector<128xf32>
    %44 = vector.multi_reduction <add>, %43, %cst_17 [0] : vector<128x128xf32> to vector<128xf32>
    %45 = vector.shape_cast %44 : vector<128xf32> to vector<1x128xf32>
    %46 = arith.addf %41, %45 : vector<1x128xf32>
    %c0_18 = arith.constant 0 : index
    %c0_19 = arith.constant 0 : index
    %47 = vector.load %arg9[%c0_18, %c0_19] : memref<1x128xf32, #tpu.memory_space<vmem>>, vector<1x128xf32>
    tpu.vector_store %arg9[%c0_18, %c0_19], %46 {strides = array<i32>} : memref<1x128xf32, #tpu.memory_space<vmem>>, vector<1x128xf32>,
    %c0_20 = arith.constant 0 : index
    %c0_21 = arith.constant 0 : index
    %48 = vector.load %arg7[%c0_20, %c0_21] : memref<1x1xf32, #tpu.memory_space<vmem>>, vector<1x1xf32>
    tpu.vector_store %arg7[%c0_20, %c0_21], %27 {strides = array<i32>} : memref<1x1xf32, #tpu.memory_space<vmem>>, vector<1x1xf32>,
    %c2_i32 = arith.constant 2 : i32
    %49 = arith.cmpi eq, %arg0, %c2_i32 : i32
    %50 = arith.extui %49 : i1 to i32
    %c0_i32_22 = arith.constant 0 : i32
    %51 = arith.cmpi ne, %50, %c0_i32_22 : i32
    scf.if %51 {
      %c0_23 = arith.constant 0 : index
      %c0_24 = arith.constant 0 : index
      %52 = vector.load %arg9[%c0_23, %c0_24] : memref<1x128xf32, #tpu.memory_space<vmem>>, vector<1x128xf32>
      %c0_25 = arith.constant 0 : index
      %c0_26 = arith.constant 0 : index
      %53 = vector.load %arg8[%c0_25, %c0_26] : memref<1x1xf32, #tpu.memory_space<vmem>>, vector<1x1xf32>
      %54 = tpu.reciprocal %53 : vector<1x1xf32> -> vector<1x1xf32>
      %55 = vector.broadcast %54 : vector<1x1xf32> to vector<1x128xf32>
      %56 = arith.mulf %52, %55 : vector<1x128xf32>
      %cst_27 = arith.constant dense<0.000000e+00> : vector<1xf32>
      %57 = vector.multi_reduction <add>, %56, %cst_27 [1] : vector<1x128xf32> to vector<1xf32>
      %58 = vector.shape_cast %57 : vector<1xf32> to vector<1x1xf32>
      %cst_28 = arith.constant 1.280000e+02 : f32
      %59 = vector.broadcast %cst_28 : f32 to vector<1x1xf32>
      %60 = arith.divf %58, %59 : vector<1x1xf32>
      %61 = vector.broadcast %60 : vector<1x1xf32> to vector<1x128xf32>
      %62 = arith.subf %56, %61 : vector<1x128xf32>
      %63 = arith.mulf %62, %62 : vector<1x128xf32>
      %cst_29 = arith.constant dense<0.000000e+00> : vector<1xf32>
      %64 = vector.multi_reduction <add>, %63, %cst_29 [1] : vector<1x128xf32> to vector<1xf32>
      %65 = vector.shape_cast %64 : vector<1xf32> to vector<1x1xf32>
      %cst_30 = arith.constant 1.280000e+02 : f32
      %66 = vector.broadcast %cst_30 : f32 to vector<1x1xf32>
      %67 = arith.divf %65, %66 : vector<1x1xf32>
      %cst_31 = arith.constant 9.99999974E-6 : f32
      %68 = vector.broadcast %cst_31 : f32 to vector<1x1xf32>
      %69 = arith.addf %67, %68 : vector<1x1xf32>
      %70 = math.rsqrt %69 : vector<1x1xf32>
      %71 = vector.broadcast %70 : vector<1x1xf32> to vector<1x128xf32>
      %72 = arith.mulf %62, %71 : vector<1x128xf32>
      %c0_32 = arith.constant 0 : index
      %c0_33 = arith.constant 0 : index
      %73 = vector.load %arg4[%c0_32, %c0_33] : memref<1x128xf32, #tpu.memory_space<vmem>>, vector<1x128xf32>
      %c0_34 = arith.constant 0 : index
      %c0_35 = arith.constant 0 : index
      %74 = vector.load %arg5[%c0_34, %c0_35] : memref<1x128xf32, #tpu.memory_space<vmem>>, vector<1x128xf32>
      %75 = arith.mulf %72, %73 : vector<1x128xf32>
      %76 = arith.addf %75, %74 : vector<1x128xf32>
      %c0_36 = arith.constant 0 : index
      %c0_37 = arith.constant 0 : index
      %77 = vector.load %arg6[%c0_36, %c0_37] : memref<1x128xf32, #tpu.memory_space<vmem>>, vector<1x128xf32>
      tpu.vector_store %arg6[%c0_36, %c0_37], %76 {strides = array<i32>} : memref<1x128xf32, #tpu.memory_space<vmem>>, vector<1x128xf32>,
    } else {
    }
    return
  }
  func.func @transform_0(%arg0: i32) -> (i32, i32) {
    %c0_i32 = arith.constant 0 : i32
    %c0_i32_0 = arith.constant 0 : i32
    return %arg0, %c0_i32 : i32, i32
  }
  func.func @transform_1(%arg0: i32) -> (i32, i32) {
    %c0_i32 = arith.constant 0 : i32
    %c0_i32_0 = arith.constant 0 : i32
    %c0_i32_1 = arith.constant 0 : i32
    return %c0_i32, %c0_i32_0 : i32, i32
  }
  func.func @transform_2(%arg0: i32) -> i32 {
    %c0_i32 = arith.constant 0 : i32
    %c0_i32_0 = arith.constant 0 : i32
    return %c0_i32 : i32
  }
  func.func @transform_3(%arg0: i32) -> (i32, i32) {
    %c0_i32 = arith.constant 0 : i32
    %c0_i32_0 = arith.constant 0 : i32
    %c0_i32_1 = arith.constant 0 : i32
    return %c0_i32, %c0_i32_0 : i32, i32
  }
  func.func @transform_4(%arg0: i32) -> (i32, i32) {
    %c0_i32 = arith.constant 0 : i32
    %c0_i32_0 = arith.constant 0 : i32
    %c0_i32_1 = arith.constant 0 : i32
    return %c0_i32, %c0_i32_0 : i32, i32
  }
  func.func @transform_5(%arg0: i32) -> (i32, i32) {
    %c0_i32 = arith.constant 0 : i32
    %c0_i32_0 = arith.constant 0 : i32
    %c0_i32_1 = arith.constant 0 : i32
    return %c0_i32, %c0_i32_0 : i32, i32
  }
}

</mosaic_0001>

<llo_original>
// kernel: tpu_custom_call.1
$region0: #{tpu_custom_call.1}
  #allocation0 [shape = 'u32[]', space=smem, size = 0x4, offset = 0x4, fixed_abs, tag = 'smem constant byte address 0x4 - core index']
  #allocation1 [shape = 'u32[144,128]{1,0:T(1,128)}', space=vmem, size = 0x12000, scoped, tag = 'internal scratch']
  #allocation2 [shape = 'f32[1,1]{1,0:T(1,128)}', space=vmem, size = 0x200, scoped, tag = 'scratch operand']
  #allocation3 [shape = 'f32[1,1]{1,0:T(1,128)}', space=vmem, size = 0x200, scoped, tag = 'scratch operand']
  #allocation4 [shape = 'f32[1,128]{1,0:T(1,128)}', space=vmem, size = 0x200, scoped, tag = 'scratch operand']
  #allocation5 [shape = 'f32[1]{0:T(128)S(6)}', space=smem, size = 0x200, scoped, tag = 'scoped memory for tpu_custom_call.1']
  %s0 = inlined_call_operand.hbm [shape: f32[300,128], index: 0, kind: input, shape index: {}]
  %s1 = inlined_call_operand.vmem [shape: f32[1,128], index: 1, kind: input, shape index: {}]
  %s2 = inlined_call_operand.<no memory space> [shape: f32[1], index: 2, kind: input, shape index: {}]
  %s3 = inlined_call_operand.vmem [shape: f32[1,128], index: 3, kind: input, shape index: {}]
  %s4 = inlined_call_operand.vmem [shape: f32[1,128], index: 4, kind: input, shape index: {}]
  %s5 = inlined_call_operand.hbm [shape: f32[1,128], index: 5, kind: output, shape index: {}]
  %s6 = sld [smem:[#allocation0]]
  $region65: #{tpu_custom_call.1} parent=0
    _
  %s8 = ssub.s32 1, %s6
  %s9 = scalar_select 0, %s8, %s6
  %10 = sst [smem:[#allocation5]] %s2
  $region1: #{tpu_custom_call.1} parent=0
    #allocation6 [shape = 'u8[131072]{0}', space=vmem, size = 0x20000, scoped, tag = 'input window, operand 0']
    #allocation7 [shape = 's32[2]{0}', space=sflag, size = 0x8, scoped, tag = 'scoped memory for tpu_custom_call.1']
    #allocation8 [shape = 's32[2]{0}', space=sflag, size = 0x8, scoped, tag = 'scoped memory for tpu_custom_call.1']
    #allocation9 [shape = 'u8[512]{0}', space=vmem, size = 0x400, scoped, tag = 'output window, operand 0, single buffered']
    %11 = vsyncpa [#allocation7], 0
    %s12 = scalar_lea.sflag [#allocation7], 1
    %13 = vsyncpa %s12, 0
    %14 = vsyncpa [#allocation8], 0
    loop: start=0, step=1, limit=5
    $region2: #{tpu_custom_call.1} parent=1 // loop_pre_header
      _
    $region3: #{tpu_custom_call.1} parent=1 // loop_header
      %s16 = sphi 0, %s20
      %p17 = scmp.ge.s32.totalorder %s16, 5
      %s26 = sphi 0, %s28
      %s29 = sphi 0, %s26
      %s30 = sphi 0, %s29
      %s46 = sphi 0, %s30
      %s50 = sphi 0, %s50
      %s52 = sphi 0, %s50
      %s53 = sphi 0, %s52
      %s67 = sphi 0, %s53
      %s71 = sphi 0, %s71
      %s73 = sphi 0, %s71
      %s74 = sphi 0, %s73
      %s88 = sphi 0, %s74
      %s92 = sphi 0, %s92
      %s94 = sphi 0, %s92
      %s95 = sphi 0, %s94
      %s109 = sphi 0, %s95
      %s113 = sphi 0, %s113
      %s115 = sphi 0, %s113
      %s116 = sphi 0, %s115
      %s130 = sphi 0, %s116
      %s134 = sphi 0, %s134
      %s136 = sphi 0, %s134
      %s137 = sphi 0, %s136
      %s151 = sphi 0, %s137
    $region4: #{tpu_custom_call.1} parent=1 // loop_header_branch
      %19 = sbr.rel (%p17) target = $region8
    $region5: #{tpu_custom_call.1} parent=1 // loop_body
      %s21 = ssub.s32 %s16, 1
      %s22 = ssub.s32 %s16, 2
      %s23 = sadd.s32 %s16, 1
      %s24 = ssub.s32 %s16, %s23
      %p25 = scmp.eq.s32.totalorder %s24, 0
      %s27 = sadd.s32 %s26, 1
      %s28 = scalar_select %p25, %s26, %s27
      %p31 = pneg %p25
      %p32 = scmp.eq.s32.totalorder %s16, 2
      %p33 = por %p31, %p32
      %p34 = scmp.ne.s32.totalorder %s26, %s29
      %p35 = scmp.eq.s32.totalorder %s16, 0
      %p36 = por %p34, %p35
      %p37 = scmp.ne.s32.totalorder %s26, %s29
      %p38 = scmp.eq.s32.totalorder %s21, 2
      %p39 = por %p37, %p38
      %p40 = scmp.ne.s32.totalorder %s29, %s30
      %p41 = scmp.eq.s32.totalorder %s21, 0
      %p42 = por %p40, %p41
      %p43 = scmp.ne.s32.totalorder %s29, %s30
      %p44 = scmp.eq.s32.totalorder %s22, 2
      %p45 = por %p43, %p44
      %p47 = scmp.ne.s32.totalorder %s30, %s46
      %p48 = scmp.eq.s32.totalorder %s22, 0
      %p49 = por %p47, %p48
      %s51 = sadd.s32 %s50, 1
      %p54 = scmp.eq.s32.totalorder %s16, 2
      %p55 = scmp.ne.s32.totalorder %s50, %s52
      %p56 = scmp.eq.s32.totalorder %s16, 0
      %p57 = por %p55, %p56
      %p58 = scmp.ne.s32.totalorder %s50, %s52
      %p59 = scmp.eq.s32.totalorder %s21, 2
      %p60 = por %p58, %p59
      %p61 = scmp.ne.s32.totalorder %s52, %s53
      %p62 = scmp.eq.s32.totalorder %s21, 0
      %p63 = por %p61, %p62
      %p64 = scmp.ne.s32.totalorder %s52, %s53
      %p65 = scmp.eq.s32.totalorder %s22, 2
      %p66 = por %p64, %p65
      %p68 = scmp.ne.s32.totalorder %s53, %s67
      %p69 = scmp.eq.s32.totalorder %s22, 0
      %p70 = por %p68, %p69
      %s72 = sadd.s32 %s71, 1
      %p75 = scmp.eq.s32.totalorder %s16, 2
      %p76 = scmp.ne.s32.totalorder %s71, %s73
      %p77 = scmp.eq.s32.totalorder %s16, 0
      %p78 = por %p76, %p77
      %p79 = scmp.ne.s32.totalorder %s71, %s73
      %p80 = scmp.eq.s32.totalorder %s21, 2
      %p81 = por %p79, %p80
      %p82 = scmp.ne.s32.totalorder %s73, %s74
      %p83 = scmp.eq.s32.totalorder %s21, 0
      %p84 = por %p82, %p83
      %p85 = scmp.ne.s32.totalorder %s73, %s74
      %p86 = scmp.eq.s32.totalorder %s22, 2
      %p87 = por %p85, %p86
      %p89 = scmp.ne.s32.totalorder %s74, %s88
      %p90 = scmp.eq.s32.totalorder %s22, 0
      %p91 = por %p89, %p90
      %s93 = sadd.s32 %s92, 1
      %p96 = scmp.eq.s32.totalorder %s16, 2
      %p97 = scmp.ne.s32.totalorder %s92, %s94
      %p98 = scmp.eq.s32.totalorder %s16, 0
      %p99 = por %p97, %p98
      %p100 = scmp.ne.s32.totalorder %s92, %s94
      %p101 = scmp.eq.s32.totalorder %s21, 2
      %p102 = por %p100, %p101
      %p103 = scmp.ne.s32.totalorder %s94, %s95
      %p104 = scmp.eq.s32.totalorder %s21, 0
      %p105 = por %p103, %p104
      %p106 = scmp.ne.s32.totalorder %s94, %s95
      %p107 = scmp.eq.s32.totalorder %s22, 2
      %p108 = por %p106, %p107
      %p110 = scmp.ne.s32.totalorder %s95, %s109
      %p111 = scmp.eq.s32.totalorder %s22, 0
      %p112 = por %p110, %p111
      %s114 = sadd.s32 %s113, 1
      %p117 = scmp.eq.s32.totalorder %s16, 2
      %p118 = scmp.ne.s32.totalorder %s113, %s115
      %p119 = scmp.eq.s32.totalorder %s16, 0
      %p120 = por %p118, %p119
      %p121 = scmp.ne.s32.totalorder %s113, %s115
      %p122 = scmp.eq.s32.totalorder %s21, 2
      %p123 = por %p121, %p122
      %p124 = scmp.ne.s32.totalorder %s115, %s116
      %p125 = scmp.eq.s32.totalorder %s21, 0
      %p126 = por %p124, %p125
      %p127 = scmp.ne.s32.totalorder %s115, %s116
      %p128 = scmp.eq.s32.totalorder %s22, 2
      %p129 = por %p127, %p128
      %p131 = scmp.ne.s32.totalorder %s116, %s130
      %p132 = scmp.eq.s32.totalorder %s22, 0
      %p133 = por %p131, %p132
      %s135 = sadd.s32 %s134, 1
      %p138 = scmp.eq.s32.totalorder %s16, 2
      %p139 = scmp.ne.s32.totalorder %s134, %s136
      %p140 = scmp.eq.s32.totalorder %s16, 0
      %p141 = por %p139, %p140
      %p142 = scmp.ne.s32.totalorder %s134, %s136
      %p143 = scmp.eq.s32.totalorder %s21, 2
      %p144 = por %p142, %p143
      %p145 = scmp.ne.s32.totalorder %s136, %s137
      %p146 = scmp.eq.s32.totalorder %s21, 0
      %p147 = por %p145, %p146
      %p148 = scmp.ne.s32.totalorder %s136, %s137
      %p149 = scmp.eq.s32.totalorder %s22, 2
      %p150 = por %p148, %p149
      %p152 = scmp.ne.s32.totalorder %s137, %s151
      %p153 = scmp.eq.s32.totalorder %s22, 0
      %p154 = por %p152, %p153
      %p155 = scmp.le.s32.totalorder 1, %s16
      %p156 = scmp.lt.s32.totalorder %s16, 4
      %p157 = pnand %p155, %p156
      %p158 = pneg %p157
      // Predicated region
      $region9: #{tpu_custom_call.1} parent=5 // pred_check
        _
      $region10: #{tpu_custom_call.1} parent=5 // pred_check_branch
        %160 = sbr.rel (%p157) target = $region12
      $region11: #{tpu_custom_call.1} parent=5 // pred_region
        %s161 = ssub.s32 %s16, 1
        // Predicated region
        $region13: #{tpu_custom_call.1} parent=11 // pred_check
          %p162 = pneg %p63
        $region14: #{tpu_custom_call.1} parent=11 // pred_check_branch
          %164 = sbr.rel (%p162) target = $region16
        $region15: #{tpu_custom_call.1} parent=11 // pred_region
          _
        $region16: #{tpu_custom_call.1} parent=11 // pred_fallthru
          _
        // Predicated region
        $region17: #{tpu_custom_call.1} parent=11 // pred_check
          %p165 = pneg %p84
        $region18: #{tpu_custom_call.1} parent=11 // pred_check_branch
          %167 = sbr.rel (%p165) target = $region20
        $region19: #{tpu_custom_call.1} parent=11 // pred_region
          _
        $region20: #{tpu_custom_call.1} parent=11 // pred_fallthru
          _
        // Predicated region
        $region21: #{tpu_custom_call.1} parent=11 // pred_check
          %p168 = pneg %p105
        $region22: #{tpu_custom_call.1} parent=11 // pred_check_branch
          %170 = sbr.rel (%p168) target = $region24
        $region23: #{tpu_custom_call.1} parent=11 // pred_region
          _
        $region24: #{tpu_custom_call.1} parent=11 // pred_fallthru
          _
        // Predicated region
        $region25: #{tpu_custom_call.1} parent=11 // pred_check
          %p171 = pneg %p126
        $region26: #{tpu_custom_call.1} parent=11 // pred_check_branch
          %173 = sbr.rel (%p171) target = $region28
        $region27: #{tpu_custom_call.1} parent=11 // pred_region
          _
        $region28: #{tpu_custom_call.1} parent=11 // pred_fallthru
          _
      $region12: #{tpu_custom_call.1} parent=5 // pred_fallthru
        _
      %p174 = scmp.lt.s32.totalorder %s16, 3
      // Predicated region
      $region29: #{tpu_custom_call.1} parent=5 // pred_check
        %p175 = pneg %p174
      $region30: #{tpu_custom_call.1} parent=5 // pred_check_branch
        %177 = sbr.rel (%p175) target = $region32
      $region31: #{tpu_custom_call.1} parent=5 // pred_region
        // Predicated region
        $region33: #{tpu_custom_call.1} parent=31 // pred_check
          %p178 = pneg %p36
        $region34: #{tpu_custom_call.1} parent=31 // pred_check_branch
          %180 = sbr.rel (%p178) target = $region36
        $region35: #{tpu_custom_call.1} parent=31 // pred_region
          %s181 = sand.u32 %s26, 1
          %s182 = scalar_lea.sflag [#allocation7], %s181
          %s183 = sand.u32 %s26, 1
          %s184 = smul.addr %s183, 128
          %s185 = scalar_lea.vmem [#allocation6], %s184
          %s186 = smul.u32 16, %s16
          %s187 = ssub.s32 38, %s186
          %p188 = scmp.lt.s32.totalorder %s187, 16
          %s189 = scalar_select %p188, %s187, 16
          %s190 = smul.u32 128, %s189
          %s192 = ssub.s32 2048, %s190
          %193 = vsyncadd %s182, %s192
          %p194 = scmp.ne.s32.totalorder 0, %s190
          %s195 = smul.addr %s186, 128
          %s196 = scalar_lea.hbm %s0, %s195
          %s197 = smul.u32 8, %s189
          %s198 = sshll.u32 %s185, 4
          %s199 = int_to_ptr.vmem [resolvable:$true] %s198
          %s200 = sshll.u32 %s197, 4
          %204 = dma.hbm_to_vmem [thread:$0]  (%p194), %s196, %s200, %s199, %s182, 128, 128, 8
        $region36: #{tpu_custom_call.1} parent=31 // pred_fallthru
          _
      $region32: #{tpu_custom_call.1} parent=5 // pred_fallthru
        _
      %p205 = scmp.le.s32.totalorder 1, %s16
      %p206 = scmp.lt.s32.totalorder %s16, 4
      %p207 = pnand %p205, %p206
      %p208 = pneg %p207
      // Predicated region
      $region37: #{tpu_custom_call.1} parent=5 // pred_check
        _
      $region38: #{tpu_custom_call.1} parent=5 // pred_check_branch
        %210 = sbr.rel (%p207) target = $region40
      $region39: #{tpu_custom_call.1} parent=5 // pred_region
        %s211 = ssub.s32 %s16, 1
        %s212 = sand.u32 %s29, 1
        %s213 = scalar_lea.sflag [#allocation7], %s212
        %s214 = sand.u32 %s29, 1
        %s215 = smul.addr %s214, 128
        %s216 = scalar_lea.vmem [#allocation6], %s215
        // Predicated region
        $region41: #{tpu_custom_call.1} parent=39 // pred_check
          %p217 = pneg %p42
        $region42: #{tpu_custom_call.1} parent=39 // pred_check_branch
          %219 = sbr.rel (%p217) target = $region44
        $region43: #{tpu_custom_call.1} parent=39 // pred_region
          %220 = dma.done %s213, 2048
        $region44: #{tpu_custom_call.1} parent=39 // pred_fallthru
          _
        %s221 = sand.u32 %s29, 1
        %s222 = scalar_lea.sflag [#allocation7], %s221
        %s223 = sand.u32 %s29, 1
        %s224 = smul.addr %s223, 128
        %s225 = scalar_lea.vmem [#allocation6], %s224
        %p226 = pneg %p42
        %p227 = pneg %p39
        %p228 = pneg %p63
        %p229 = pneg %p60
        %p230 = pneg %p84
        %p231 = pneg %p81
        %p232 = pneg %p105
        %p233 = pneg %p102
        %p234 = pneg %p126
        %p235 = pneg %p123
        %p236 = pneg %p147
        %p237 = pneg %p144
        %s238 = smul.u32 16, %s21
        %s239 = ssub.s32 38, %s238
        %p240 = scmp.lt.s32.totalorder %s239, 16
        %s241 = scalar_select %p240, %s239, 16
        %s242 = smul.u32 128, %s241
        %p243 = scmp.eq.s32.totalorder %s21, 0
        // Predicated region
        $region45: #{tpu_custom_call.1} parent=39 // pred_check
          %p244 = pneg %p243
        $region46: #{tpu_custom_call.1} parent=39 // pred_check_branch
          %246 = sbr.rel (%p244) target = $region48
        $region47: #{tpu_custom_call.1} parent=39 // pred_region
          %vm247 = vcmask 0
          %248 = vst.msk [vmem:[#allocation2] sm:$0x1] %vm247, -inf
          %249 = vst.msk [vmem:[#allocation3] sm:$0x1] %vm247, 0.0
          %250 = vst [vmem:[#allocation4] sm:$0x1] 0.0
        $region48: #{tpu_custom_call.1} parent=39 // pred_fallthru
          _
        %v251 = vld [vmem:[%s216] sm:$0xff]
        %v252 = vld [vmem:[%s216 + $0x8] sm:$0xff]
        %v253 = vld [vmem:[%s216 + $0x10] sm:$0xff]
        %v254 = vld [vmem:[%s216 + $0x18] sm:$0xff]
        %v255 = vld [vmem:[%s216 + $0x20] sm:$0xff]
        %v256 = vld [vmem:[%s216 + $0x28] sm:$0xff]
        %v257 = vld [vmem:[%s216 + $0x30] sm:$0xff]
        %v258 = vld [vmem:[%s216 + $0x38] sm:$0xff]
        %v259 = vld [vmem:[%s216 + $0x40] sm:$0xff]
        %v260 = vld [vmem:[%s216 + $0x48] sm:$0xff]
        %v261 = vld [vmem:[%s216 + $0x50] sm:$0xff]
        %v262 = vld [vmem:[%s216 + $0x58] sm:$0xff]
        %v263 = vld [vmem:[%s216 + $0x60] sm:$0xff]
        %v264 = vld [vmem:[%s216 + $0x68] sm:$0xff]
        %v265 = vld [vmem:[%s216 + $0x70] sm:$0xff]
        %v266 = vld [vmem:[%s216 + $0x78] sm:$0xff]
        %v267 = vld [vmem:[%s1] sm:$0x1]
        %s268 = sld [smem:[#allocation5]]
        %v269 = vlaneseq
        %v270 = vshrl.u32 %v269, 7
        %v271 = vadd.s32 %v270, 8
        %v272 = vadd.s32 %v270, 16
        %v273 = vadd.s32 %v270, 24
        %v274 = vadd.s32 %v270, 32
        %v275 = vadd.s32 %v270, 40
        %v276 = vadd.s32 %v270, 48
        %v277 = vadd.s32 %v270, 56
        %v278 = vadd.s32 %v270, 64
        %v279 = vadd.s32 %v270, 72
        %v280 = vadd.s32 %v270, 80
        %v281 = vadd.s32 %v270, 88
        %v282 = vadd.s32 %v270, 96
        %v283 = vadd.s32 %v270, 104
        %v284 = vadd.s32 %v270, 112
        %v285 = vadd.s32 %v270, 120
        %s286 = smul.u32 %s21, 128
        %v287 = vstv %s286
        %v288 = vadd.s32 %v270, %v287
        %v289 = vadd.s32 %v271, %v287
        %v290 = vadd.s32 %v272, %v287
        %v291 = vadd.s32 %v273, %v287
        %v292 = vadd.s32 %v274, %v287
        %v293 = vadd.s32 %v275, %v287
        %v294 = vadd.s32 %v276, %v287
        %v295 = vadd.s32 %v277, %v287
        %v296 = vadd.s32 %v278, %v287
        %v297 = vadd.s32 %v279, %v287
        %v298 = vadd.s32 %v280, %v287
        %v299 = vadd.s32 %v281, %v287
        %v300 = vadd.s32 %v282, %v287
        %v301 = vadd.s32 %v283, %v287
        %v302 = vadd.s32 %v284, %v287
        %v303 = vadd.s32 %v285, %v287
        %vm304 = vcmp.lt.s32.totalorder %v288, 300
        %vm305 = vcmp.lt.s32.totalorder %v289, 300
        %vm306 = vcmp.lt.s32.totalorder %v290, 300
        %vm307 = vcmp.lt.s32.totalorder %v291, 300
        %vm308 = vcmp.lt.s32.totalorder %v292, 300
        %vm309 = vcmp.lt.s32.totalorder %v293, 300
        %vm310 = vcmp.lt.s32.totalorder %v294, 300
        %vm311 = vcmp.lt.s32.totalorder %v295, 300
        %vm312 = vcmp.lt.s32.totalorder %v296, 300
        %vm313 = vcmp.lt.s32.totalorder %v297, 300
        %vm314 = vcmp.lt.s32.totalorder %v298, 300
        %vm315 = vcmp.lt.s32.totalorder %v299, 300
        %vm316 = vcmp.lt.s32.totalorder %v300, 300
        %vm317 = vcmp.lt.s32.totalorder %v301, 300
        %vm318 = vcmp.lt.s32.totalorder %v302, 300
        %vm319 = vcmp.lt.s32.totalorder %v303, 300
        %v320 = vsel %vm304, 1, 0
        %v321 = vsel %vm305, 1, 0
        %v322 = vsel %vm306, 1, 0
        %v323 = vsel %vm307, 1, 0
        %v324 = vsel %vm308, 1, 0
        %v325 = vsel %vm309, 1, 0
        %v326 = vsel %vm310, 1, 0
        %v327 = vsel %vm311, 1, 0
        %v328 = vsel %vm312, 1, 0
        %v329 = vsel %vm313, 1, 0
        %v330 = vsel %vm314, 1, 0
        %v331 = vsel %vm315, 1, 0
        %v332 = vsel %vm316, 1, 0
        %v333 = vsel %vm317, 1, 0
        %v334 = vsel %vm318, 1, 0
        %v335 = vsel %vm319, 1, 0
        %vm336 = vcmp.eq.s32.totalorder %v320, 1
        %vm337 = vcmp.eq.s32.totalorder %v321, 1
        %vm338 = vcmp.eq.s32.totalorder %v322, 1
        %vm339 = vcmp.eq.s32.totalorder %v323, 1
        %vm340 = vcmp.eq.s32.totalorder %v324, 1
        %vm341 = vcmp.eq.s32.totalorder %v325, 1
        %vm342 = vcmp.eq.s32.totalorder %v326, 1
        %vm343 = vcmp.eq.s32.totalorder %v327, 1
        %vm344 = vcmp.eq.s32.totalorder %v328, 1
        %vm345 = vcmp.eq.s32.totalorder %v329, 1
        %vm346 = vcmp.eq.s32.totalorder %v330, 1
        %vm347 = vcmp.eq.s32.totalorder %v331, 1
        %vm348 = vcmp.eq.s32.totalorder %v332, 1
        %vm349 = vcmp.eq.s32.totalorder %v333, 1
        %vm350 = vcmp.eq.s32.totalorder %v334, 1
        %vm351 = vcmp.eq.s32.totalorder %v335, 1
        %v352 = vsel %vm336, %v251, 0.0
        %v353 = vsel %vm337, %v252, 0.0
        %v354 = vsel %vm338, %v253, 0.0
        %v355 = vsel %vm339, %v254, 0.0
        %v356 = vsel %vm340, %v255, 0.0
        %v357 = vsel %vm341, %v256, 0.0
        %v358 = vsel %vm342, %v257, 0.0
        %v359 = vsel %vm343, %v258, 0.0
        %v360 = vsel %vm344, %v259, 0.0
        %v361 = vsel %vm345, %v260, 0.0
        %v362 = vsel %vm346, %v261, 0.0
        %v363 = vsel %vm347, %v262, 0.0
        %v364 = vsel %vm348, %v263, 0.0
        %v365 = vsel %vm349, %v264, 0.0
        %v366 = vsel %vm350, %v265, 0.0
        %v367 = vsel %vm351, %v266, 0.0
        %v369 = vlaneseq
        %v370 = vshrl.u32 %v369, 7
        %v371 = vsub.s32 0, %v370
        %v372 = vrot.slane %v267, %v371
        %v374 = vmul.f32 %v352, %v372
        %v375 = vmul.f32 %v353, %v372
        %v376 = vmul.f32 %v354, %v372
        %v377 = vmul.f32 %v355, %v372
        %v378 = vmul.f32 %v356, %v372
        %v379 = vmul.f32 %v357, %v372
        %v380 = vmul.f32 %v358, %v372
        %v381 = vmul.f32 %v359, %v372
        %v382 = vmul.f32 %v360, %v372
        %v383 = vmul.f32 %v361, %v372
        %v384 = vmul.f32 %v362, %v372
        %v385 = vmul.f32 %v363, %v372
        %v386 = vmul.f32 %v364, %v372
        %v387 = vmul.f32 %v365, %v372
        %v388 = vmul.f32 %v366, %v372
        %v389 = vmul.f32 %v367, %v372
        %390 = vadd.xlane.f32.xlu0 %v374
        %v391 = vpop.xlane.xlu0 %390
        %392 = vadd.xlane.f32.xlu0 %v375
        %v393 = vpop.xlane.xlu0 %392
        %394 = vadd.xlane.f32.xlu0 %v376
        %v395 = vpop.xlane.xlu0 %394
        %396 = vadd.xlane.f32.xlu0 %v377
        %v397 = vpop.xlane.xlu0 %396
        %398 = vadd.xlane.f32.xlu0 %v378
        %v399 = vpop.xlane.xlu0 %398
        %400 = vadd.xlane.f32.xlu0 %v379
        %v401 = vpop.xlane.xlu0 %400
        %402 = vadd.xlane.f32.xlu0 %v380
        %v403 = vpop.xlane.xlu0 %402
        %404 = vadd.xlane.f32.xlu0 %v381
        %v405 = vpop.xlane.xlu0 %404
        %406 = vadd.xlane.f32.xlu0 %v382
        %v407 = vpop.xlane.xlu0 %406
        %408 = vadd.xlane.f32.xlu0 %v383
        %v409 = vpop.xlane.xlu0 %408
        %410 = vadd.xlane.f32.xlu0 %v384
        %v411 = vpop.xlane.xlu0 %410
        %412 = vadd.xlane.f32.xlu0 %v385
        %v413 = vpop.xlane.xlu0 %412
        %414 = vadd.xlane.f32.xlu0 %v386
        %v415 = vpop.xlane.xlu0 %414
        %416 = vadd.xlane.f32.xlu0 %v387
        %v417 = vpop.xlane.xlu0 %416
        %418 = vadd.xlane.f32.xlu0 %v388
        %v419 = vpop.xlane.xlu0 %418
        %420 = vadd.xlane.f32.xlu0 %v389
        %v421 = vpop.xlane.xlu0 %420
        %v422 = vstv %s268
        %v423 = vadd.f32 %v391, %v422
        %v424 = vadd.f32 %v393, %v422
        %v425 = vadd.f32 %v395, %v422
        %v426 = vadd.f32 %v397, %v422
        %v427 = vadd.f32 %v399, %v422
        %v428 = vadd.f32 %v401, %v422
        %v429 = vadd.f32 %v403, %v422
        %v430 = vadd.f32 %v405, %v422
        %v431 = vadd.f32 %v407, %v422
        %v432 = vadd.f32 %v409, %v422
        %v433 = vadd.f32 %v411, %v422
        %v434 = vadd.f32 %v413, %v422
        %v435 = vadd.f32 %v415, %v422
        %v436 = vadd.f32 %v417, %v422
        %v437 = vadd.f32 %v419, %v422
        %v438 = vadd.f32 %v421, %v422
        %v439 = vsel %vm304, %v423, -inf
        %v440 = vsel %vm305, %v424, -inf
        %v441 = vsel %vm306, %v425, -inf
        %v442 = vsel %vm307, %v426, -inf
        %v443 = vsel %vm308, %v427, -inf
        %v444 = vsel %vm309, %v428, -inf
        %v445 = vsel %vm310, %v429, -inf
        %v446 = vsel %vm311, %v430, -inf
        %v447 = vsel %vm312, %v431, -inf
        %v448 = vsel %vm313, %v432, -inf
        %v449 = vsel %vm314, %v433, -inf
        %v450 = vsel %vm315, %v434, -inf
        %v451 = vsel %vm316, %v435, -inf
        %v452 = vsel %vm317, %v436, -inf
        %v453 = vsel %vm318, %v437, -inf
        %v454 = vsel %vm319, %v438, -inf
        %v455 = vld [vmem:[#allocation2] sm:$0x1]
        %v456 = vmax.f32 %v439, %v443
        %v457 = vmax.f32 %v440, %v444
        %v458 = vmax.f32 %v441, %v445
        %v459 = vmax.f32 %v442, %v446
        %v460 = vmax.f32 %v456, %v447
        %v461 = vmax.f32 %v457, %v448
        %v462 = vmax.f32 %v458, %v449
        %v463 = vmax.f32 %v459, %v450
        %v464 = vmax.f32 %v460, %v451
        %v465 = vmax.f32 %v461, %v452
        %v466 = vmax.f32 %v462, %v453
        %v467 = vmax.f32 %v463, %v454
        %v468 = vmax.f32 %v464, %v465
        %v469 = vmax.f32 %v466, %v467
        %v470 = vmax.f32 %v468, %v469
        %v471 = vrot.slane %v470, 4
        %v472 = vmax.f32 %v470, %v471
        %v473 = vrot.slane %v472, 2
        %v474 = vmax.f32 %v472, %v473
        %v475 = vrot.slane %v474, 1
        %v476 = vmax.f32 %v474, %v475
        %v477 = vmax.f32 %v455, %v476
        %v478 = vsub.f32 %v455, %v477
        %v479 = vmul.f32 %v478, 1.442695
        %v480 = vpow.pop %v479
        %v482 = vlaneseq
        %v483 = vshrl.u32 %v482, 7
        %v484 = vsub.s32 0, %v483
        %v485 = vrot.slane %v477, %v484
        %v487 = vsub.f32 %v439, %v485
        %v488 = vsub.f32 %v440, %v485
        %v489 = vsub.f32 %v441, %v485
        %v490 = vsub.f32 %v442, %v485
        %v491 = vsub.f32 %v443, %v485
        %v492 = vsub.f32 %v444, %v485
        %v493 = vsub.f32 %v445, %v485
        %v494 = vsub.f32 %v446, %v485
        %v495 = vsub.f32 %v447, %v485
        %v496 = vsub.f32 %v448, %v485
        %v497 = vsub.f32 %v449, %v485
        %v498 = vsub.f32 %v450, %v485
        %v499 = vsub.f32 %v451, %v485
        %v500 = vsub.f32 %v452, %v485
        %v501 = vsub.f32 %v453, %v485
        %v502 = vsub.f32 %v454, %v485
        %v503 = vmul.f32 %v487, 1.442695
        %v504 = vpow.pop %v503
        %v505 = vmul.f32 %v488, 1.442695
        %v506 = vpow.pop %v505
        %v507 = vmul.f32 %v489, 1.442695
        %v508 = vpow.pop %v507
        %v509 = vmul.f32 %v490, 1.442695
        %v510 = vpow.pop %v509
        %v511 = vmul.f32 %v491, 1.442695
        %v512 = vpow.pop %v511
        %v513 = vmul.f32 %v492, 1.442695
        %v514 = vpow.pop %v513
        %v515 = vmul.f32 %v493, 1.442695
        %v516 = vpow.pop %v515
        %v517 = vmul.f32 %v494, 1.442695
        %v518 = vpow.pop %v517
        %v519 = vmul.f32 %v495, 1.442695
        %v520 = vpow.pop %v519
        %v521 = vmul.f32 %v496, 1.442695
        %v522 = vpow.pop %v521
        %v523 = vmul.f32 %v497, 1.442695
        %v524 = vpow.pop %v523
        %v525 = vmul.f32 %v498, 1.442695
        %v526 = vpow.pop %v525
        %v527 = vmul.f32 %v499, 1.442695
        %v528 = vpow.pop %v527
        %v529 = vmul.f32 %v500, 1.442695
        %v530 = vpow.pop %v529
        %v531 = vmul.f32 %v501, 1.442695
        %v532 = vpow.pop %v531
        %v533 = vmul.f32 %v502, 1.442695
        %v534 = vpow.pop %v533
        %v535 = vld [vmem:[#allocation3] sm:$0x1]
        %v536 = vmul.f32 %v480, %v535
        %vm537 = vcmask 7168
        %v538 = vsel %vm537, %v504, 0.0
        %v539 = vsel %vm537, %v506, 0.0
        %v540 = vadd.f32 %v538, %v539
        %v541 = vsel %vm537, %v508, 0.0
        %v542 = vadd.f32 %v540, %v541
        %v543 = vsel %vm537, %v510, 0.0
        %v544 = vadd.f32 %v542, %v543
        %v545 = vsel %vm537, %v512, 0.0
        %v546 = vadd.f32 %v544, %v545
        %v547 = vsel %vm537, %v514, 0.0
        %v548 = vadd.f32 %v546, %v547
        %v549 = vsel %vm537, %v516, 0.0
        %v550 = vadd.f32 %v548, %v549
        %v551 = vsel %vm537, %v518, 0.0
        %v552 = vadd.f32 %v550, %v551
        %v553 = vsel %vm537, %v520, 0.0
        %v554 = vadd.f32 %v552, %v553
        %v555 = vsel %vm537, %v522, 0.0
        %v556 = vadd.f32 %v554, %v555
        %v557 = vsel %vm537, %v524, 0.0
        %v558 = vadd.f32 %v556, %v557
        %v559 = vsel %vm537, %v526, 0.0
        %v560 = vadd.f32 %v558, %v559
        %v561 = vsel %vm537, %v528, 0.0
        %v562 = vadd.f32 %v560, %v561
        %v563 = vsel %vm537, %v530, 0.0
        %v564 = vadd.f32 %v562, %v563
        %v565 = vsel %vm537, %v532, 0.0
        %v566 = vadd.f32 %v564, %v565
        %v567 = vsel %vm537, %v534, 0.0
        %v568 = vadd.f32 %v566, %v567
        %v569 = vrot.slane %v568, 4
        %v570 = vadd.f32 %v568, %v569
        %v571 = vrot.slane %v570, 2
        %v572 = vadd.f32 %v570, %v571
        %v573 = vrot.slane %v572, 1
        %v574 = vadd.f32 %v572, %v573
        %v575 = vadd.f32 %v536, %v574
        %vm576 = vcmask 0
        %577 = vst.msk [vmem:[#allocation3] sm:$0x1] %vm576, %v575
        %v578 = vld [vmem:[#allocation4] sm:$0x1]
        %580 = vset.pattern.permute.xlu0 0
        %581 = vperm.xlu0 %580, %v480
        %v582 = vpop.permute.xlu0 %581
        %v584 = vlaneseq
        %v585 = vshrl.u32 %v584, 7
        %v586 = vsub.s32 0, %v585
        %v587 = vrot.slane %v582, %v586
        %v588 = vmul.f32 %v587, %v578
        %590 = vset.pattern.permute.xlu0 0
        %591 = vperm.xlu0 %590, %v504
        %v592 = vpop.permute.xlu0 %591
        %595 = vset.pattern.permute.xlu0 0
        %596 = vperm.xlu0 %595, %v506
        %v597 = vpop.permute.xlu0 %596
        %600 = vset.pattern.permute.xlu0 0
        %601 = vperm.xlu0 %600, %v508
        %v602 = vpop.permute.xlu0 %601
        %605 = vset.pattern.permute.xlu0 0
        %606 = vperm.xlu0 %605, %v510
        %v607 = vpop.permute.xlu0 %606
        %610 = vset.pattern.permute.xlu0 0
        %611 = vperm.xlu0 %610, %v512
        %v612 = vpop.permute.xlu0 %611
        %615 = vset.pattern.permute.xlu0 0
        %616 = vperm.xlu0 %615, %v514
        %v617 = vpop.permute.xlu0 %616
        %620 = vset.pattern.permute.xlu0 0
        %621 = vperm.xlu0 %620, %v516
        %v622 = vpop.permute.xlu0 %621
        %625 = vset.pattern.permute.xlu0 0
        %626 = vperm.xlu0 %625, %v518
        %v627 = vpop.permute.xlu0 %626
        %630 = vset.pattern.permute.xlu0 0
        %631 = vperm.xlu0 %630, %v520
        %v632 = vpop.permute.xlu0 %631
        %635 = vset.pattern.permute.xlu0 0
        %636 = vperm.xlu0 %635, %v522
        %v637 = vpop.permute.xlu0 %636
        %640 = vset.pattern.permute.xlu0 0
        %641 = vperm.xlu0 %640, %v524
        %v642 = vpop.permute.xlu0 %641
        %645 = vset.pattern.permute.xlu0 0
        %646 = vperm.xlu0 %645, %v526
        %v647 = vpop.permute.xlu0 %646
        %650 = vset.pattern.permute.xlu0 0
        %651 = vperm.xlu0 %650, %v528
        %v652 = vpop.permute.xlu0 %651
        %655 = vset.pattern.permute.xlu0 0
        %656 = vperm.xlu0 %655, %v530
        %v657 = vpop.permute.xlu0 %656
        %660 = vset.pattern.permute.xlu0 0
        %661 = vperm.xlu0 %660, %v532
        %v662 = vpop.permute.xlu0 %661
        %665 = vset.pattern.permute.xlu0 0
        %666 = vperm.xlu0 %665, %v534
        %v667 = vpop.permute.xlu0 %666
        %v669 = vmul.f32 %v352, %v592
        %v670 = vmul.f32 %v353, %v597
        %v671 = vmul.f32 %v354, %v602
        %v672 = vmul.f32 %v355, %v607
        %v673 = vmul.f32 %v356, %v612
        %v674 = vmul.f32 %v357, %v617
        %v675 = vmul.f32 %v358, %v622
        %v676 = vmul.f32 %v359, %v627
        %v677 = vmul.f32 %v360, %v632
        %v678 = vmul.f32 %v361, %v637
        %v679 = vmul.f32 %v362, %v642
        %v680 = vmul.f32 %v363, %v647
        %v681 = vmul.f32 %v364, %v652
        %v682 = vmul.f32 %v365, %v657
        %v683 = vmul.f32 %v366, %v662
        %v684 = vmul.f32 %v367, %v667
        %v685 = vadd.f32 %v669, %v670
        %v686 = vadd.f32 %v685, %v671
        %v687 = vadd.f32 %v686, %v672
        %v688 = vadd.f32 %v687, %v673
        %v689 = vadd.f32 %v688, %v674
        %v690 = vadd.f32 %v689, %v675
        %v691 = vadd.f32 %v690, %v676
        %v692 = vadd.f32 %v691, %v677
        %v693 = vadd.f32 %v692, %v678
        %v694 = vadd.f32 %v693, %v679
        %v695 = vadd.f32 %v694, %v680
        %v696 = vadd.f32 %v695, %v681
        %v697 = vadd.f32 %v696, %v682
        %v698 = vadd.f32 %v697, %v683
        %v699 = vadd.f32 %v698, %v684
        %v700 = vrot.slane %v699, 4
        %v701 = vadd.f32 %v699, %v700
        %v702 = vrot.slane %v701, 2
        %v703 = vadd.f32 %v701, %v702
        %v704 = vrot.slane %v703, 1
        %v705 = vadd.f32 %v703, %v704
        %v706 = vadd.f32 %v588, %v705
        %707 = vst [vmem:[#allocation4] sm:$0x1] %v706
        %708 = vst.msk [vmem:[#allocation2] sm:$0x1] %vm576, %v477
        %p709 = scmp.eq.s32.totalorder %s21, 2
        // Predicated region
        $region49: #{tpu_custom_call.1} parent=39 // pred_check
          %p710 = pneg %p709
        $region50: #{tpu_custom_call.1} parent=39 // pred_check_branch
          %712 = sbr.rel (%p710) target = $region52
        $region51: #{tpu_custom_call.1} parent=39 // pred_region
          %v713 = vld [vmem:[#allocation4] sm:$0x1]
          %v714 = vld [vmem:[#allocation3] sm:$0x1]
          %v715 = vrcp.pop %v714
          %717 = vset.pattern.permute.xlu0 0
          %718 = vperm.xlu0 %717, %v715
          %v719 = vpop.permute.xlu0 %718
          %v721 = vlaneseq
          %v722 = vshrl.u32 %v721, 7
          %v723 = vsub.s32 0, %v722
          %v724 = vrot.slane %v719, %v723
          %v725 = vmul.f32 %v713, %v724
          %vm726 = vcmask 1040384
          %v727 = vsel %vm726, %v725, 0.0
          %728 = vadd.xlane.f32.xlu0 %v727
          %v729 = vpop.xlane.xlu0 %728
          %v730 = vrcp.pop 128.0
          %v731 = vmul.f32 %v729, %v730
          %v732 = vsub.f32 %v725, %v731
          %v733 = vmul.f32 %v732, %v732
          %v734 = vsel %vm726, %v733, 0.0
          %735 = vadd.xlane.f32.xlu0 %v734
          %v736 = vpop.xlane.xlu0 %735
          %v737 = vmul.f32 %v736, %v730
          %v738 = vadd.f32 %v737, 1e-05
          %v739 = vrsqrt.pop %v738
          %v740 = vmul.f32 %v732, %v739
          %v741 = vld [vmem:[%s3] sm:$0x1]
          %v742 = vld [vmem:[%s4] sm:$0x1]
          %v743 = vmul.f32 %v740, %v741
          %v744 = vadd.f32 %v743, %v742
          %745 = vst [vmem:[#allocation9] sm:$0x1] %v744
        $region52: #{tpu_custom_call.1} parent=39 // pred_fallthru
          _
        // Predicated region
        $region53: #{tpu_custom_call.1} parent=39 // pred_check
          %p746 = pneg %p144
        $region54: #{tpu_custom_call.1} parent=39 // pred_check_branch
          %748 = sbr.rel (%p746) target = $region56
        $region55: #{tpu_custom_call.1} parent=39 // pred_region
          %s750 = ssub.s32 16, 16
          %751 = vsyncadd [#allocation8], %s750
          %s753 = sshll.u32 [#allocation9], 4
          %s754 = int_to_ptr.vmem [resolvable:$true] %s753
          %756 = dma.vmem_to_hbm [thread:$0]  %s754, 16, %s5, [#allocation8]
        $region56: #{tpu_custom_call.1} parent=39 // pred_fallthru
          _
        // Predicated region
        $region57: #{tpu_custom_call.1} parent=39 // pred_check
          %p757 = pneg %p144
        $region58: #{tpu_custom_call.1} parent=39 // pred_check_branch
          %759 = sbr.rel (%p757) target = $region60
        $region59: #{tpu_custom_call.1} parent=39 // pred_region
          %760 = dma.done [#allocation8], 16
        $region60: #{tpu_custom_call.1} parent=39 // pred_fallthru
          _
      $region40: #{tpu_custom_call.1} parent=5 // pred_fallthru
        _
      %p761 = scmp.le.s32.totalorder 2, %s16
      // Predicated region
      $region61: #{tpu_custom_call.1} parent=5 // pred_check
        %p762 = pneg %p761
      $region62: #{tpu_custom_call.1} parent=5 // pred_check_branch
        %764 = sbr.rel (%p762) target = $region64
      $region63: #{tpu_custom_call.1} parent=5 // pred_region
        %s765 = ssub.s32 %s16, 2
      $region64: #{tpu_custom_call.1} parent=5 // pred_fallthru
        _
    $region6: #{tpu_custom_call.1} parent=1 // loop_footer
      %s20 = sadd.s32 1, %s16
    $region7: #{tpu_custom_call.1} parent=1 // loop_footer_branch
      %15 = sbr.rel target = $region3
    $region8: #{tpu_custom_call.1} parent=1 // loop_exit
      _
    %766 = vsyncpa [#allocation7], 1
    %s767 = scalar_lea.sflag [#allocation7], 1
    %768 = vsyncpa %s767, 1
    %769 = vsyncpa [#allocation8], 1
    %s770 = scalar_lea.sflag [#allocation8], 1
    %771 = vsyncpa %s770, 1

</llo_original>
